<compile_context>
chip_gen: v7x
topology: tpu7x:2x2x1
jax: 0.10.0
libtpu: 0.0.40
codegen_flags: <defaults>
</compile_context>

<pallas_src>
import math

import jax
import jax.numpy as jnp
from jax.experimental import pallas as pl
from jax.experimental.pallas import tpu as pltpu


# ----------------------------------------------------------------------------
# Tiling helpers
# ----------------------------------------------------------------------------
def _round_up(x, m):
    return (x + m - 1) // m * m


def _pick_tile(dim, target, align):
    """Largest tile <= target that is a multiple of `align` and divides `dim`.
    Falls back to the full dim only for small dims (callers pad S and M=B*S to
    multiples of 128 so large ragged dims never hit the full-dim fallback)."""
    if dim <= target or dim % align != 0:
        return dim
    t = min(target, dim)
    t -= t % align
    while t >= align:
        if dim % t == 0:
            return t
        t -= align
    return dim


# ----------------------------------------------------------------------------
# Linear (+ bias / GELU) kernel: resident activation row panel, K-reduction axis
# ----------------------------------------------------------------------------
def _make_linear_kernel(act, tk):
    def kernel(x_ref, w_ref, b_ref, o_ref, acc_ref):
        k = pl.program_id(2)

        @pl.when(k == 0)
        def _init():
            acc_ref[...] = jnp.zeros_like(acc_ref)

        # x row panel (tm, K) stays resident across the N sweep; slice the K
        # chunk for this reduction step in-kernel (aligned dynamic lane slice).
        off = pl.multiple_of(k * tk, tk)
        acc_ref[...] += jnp.dot(x_ref[:, pl.ds(off, tk)], w_ref[...],
                                preferred_element_type=jnp.float32)

        @pl.when(k == pl.num_programs(2) - 1)
        def _finalize():
            y = acc_ref[...] + b_ref[...]
            if act == "gelu":
                y = jax.nn.gelu(y)
            o_ref[...] = y.astype(o_ref.dtype)

    return kernel


def linear(x, w, b, act=None):
    """x: [M, K] bf16, w: [K, N] bf16, b: [N] f32 -> [M, N] bf16.

    MXU-tiled matmul: large M/N tiles, K-reduction grid axis with an f32 VMEM
    accumulator, bias (+ optional GELU) fused into the epilogue.  The activation
    row panel (tm, K) is held resident across the N sweep."""
    M, K = x.shape
    N = w.shape[1]
    tm = _pick_tile(M, 512, 8)
    tn = _pick_tile(N, 1024, 128)
    tk = _pick_tile(K, 512, 128)
    return pl.pallas_call(
        _make_linear_kernel(act, tk),
        out_shape=jax.ShapeDtypeStruct((M, N), x.dtype),
        grid=(M // tm, N // tn, K // tk),
        in_specs=[
            pl.BlockSpec((tm, K), lambda i, j, k: (i, 0)),     # resident row panel
            pl.BlockSpec((tk, tn), lambda i, j, k: (k, j)),
            pl.BlockSpec((1, tn), lambda i, j, k: (0, j)),
        ],
        out_specs=pl.BlockSpec((tm, tn), lambda i, j, k: (i, j)),
        scratch_shapes=[pltpu.VMEM((tm, tn), jnp.float32)],
        compiler_params=pltpu.CompilerParams(
            dimension_semantics=("parallel", "parallel", "arbitrary")),
    )(x, w, b.reshape(1, N))


# ----------------------------------------------------------------------------
# Linear + residual-add + LayerNorm fused epilogue
# ----------------------------------------------------------------------------
def _linear_ln_kernel(x_ref, w_ref, b_ref, res_ref, g_ref, beta_ref,
                      o_ref, acc_ref):
    k = pl.program_id(1)

    @pl.when(k == 0)
    def _init():
        acc_ref[...] = jnp.zeros_like(acc_ref)

    acc_ref[...] += jnp.dot(x_ref[...], w_ref[...],
                            preferred_element_type=jnp.float32)

    @pl.when(k == pl.num_programs(1) - 1)
    def _finalize():
        y = acc_ref[...] + b_ref[...] + res_ref[...].astype(jnp.float32)
        mu = jnp.mean(y, axis=-1, keepdims=True)
        var = jnp.mean((y - mu) ** 2, axis=-1, keepdims=True)
        yn = (y - mu) * jax.lax.rsqrt(var + 1e-5)
        o_ref[...] = (yn * g_ref[...] + beta_ref[...]).astype(o_ref.dtype)


def linear_residual_layernorm(x, w, b, res, gamma, beta):
    """LayerNorm(x @ w + b + res) with residual-add + LN fused into the matmul
    epilogue.  x: [M, K] bf16, w: [K, N] bf16, res: [M, N] bf16, b/gamma/beta f32.
    N (= hidden size) stays as one lane-dense block so the epilogue sees full rows."""
    M, K = x.shape
    N = w.shape[1]
    tm = _pick_tile(M, 512, 8)
    tk = _pick_tile(K, 512, 128)
    return pl.pallas_call(
        _linear_ln_kernel,
        out_shape=jax.ShapeDtypeStruct((M, N), x.dtype),
        grid=(M // tm, K // tk),
        in_specs=[
            pl.BlockSpec((tm, tk), lambda i, k: (i, k)),
            pl.BlockSpec((tk, N), lambda i, k: (k, 0)),
            pl.BlockSpec((1, N), lambda i, k: (0, 0)),
            pl.BlockSpec((tm, N), lambda i, k: (i, 0)),
            pl.BlockSpec((1, N), lambda i, k: (0, 0)),
            pl.BlockSpec((1, N), lambda i, k: (0, 0)),
        ],
        out_specs=pl.BlockSpec((tm, N), lambda i, k: (i, 0)),
        scratch_shapes=[pltpu.VMEM((tm, N), jnp.float32)],
        compiler_params=pltpu.CompilerParams(
            dimension_semantics=("parallel", "arbitrary")),
    )(x, w, b.reshape(1, N), res, gamma.reshape(1, N), beta.reshape(1, N))


# ----------------------------------------------------------------------------
# Standalone LayerNorm (embedding LN)
# ----------------------------------------------------------------------------
def _layernorm_kernel(x_ref, g_ref, b_ref, o_ref):
    x = x_ref[...].astype(jnp.float32)
    mu = jnp.mean(x, axis=-1, keepdims=True)
    var = jnp.mean((x - mu) ** 2, axis=-1, keepdims=True)
    xn = (x - mu) * jax.lax.rsqrt(var + 1e-5)
    o_ref[...] = (xn * g_ref[...] + b_ref[...]).astype(o_ref.dtype)


def layernorm(x, gamma, beta):
    M, H = x.shape
    tm = _pick_tile(M, 512, 8)
    return pl.pallas_call(
        _layernorm_kernel,
        out_shape=jax.ShapeDtypeStruct((M, H), x.dtype),
        grid=(M // tm,),
        in_specs=[
            pl.BlockSpec((tm, H), lambda i: (i, 0)),
            pl.BlockSpec((1, H), lambda i: (0, 0)),
            pl.BlockSpec((1, H), lambda i: (0, 0)),
        ],
        out_specs=pl.BlockSpec((tm, H), lambda i: (i, 0)),
        compiler_params=pltpu.CompilerParams(dimension_semantics=("parallel",)),
    )(x, gamma.reshape(1, H), beta.reshape(1, H))


# ----------------------------------------------------------------------------
# Flash attention over the packed QKV tensor, heads as a parallel grid axis
# ----------------------------------------------------------------------------
def _make_flash_attn_kernel(hpb, hd, tq, tk, window):
    def kernel(q_ref, k_ref, v_ref, m_ref, o_ref, m_sc, l_sc, acc_sc):
        ki = pl.program_id(3)

        @pl.when(ki == 0)
        def _init():
            m_sc[...] = jnp.full(m_sc.shape, -1e30, dtype=m_sc.dtype)
            l_sc[...] = jnp.zeros_like(l_sc)
            acc_sc[...] = jnp.zeros_like(acc_sc)

        def _compute():
            q = q_ref[0]                              # (tq, hpb*hd) bf16; 1/sqrt(hd) folded into w_qkv
            k = k_ref[0]                              # (tk, hpb*hd)
            v = v_ref[0]                              # (tk, hpb*hd)
            mask = m_ref[0].astype(jnp.float32)       # (1, tk) additive 0 / -1e9
            for h in range(hpb):                      # 1 head/step (hd>=128) or 2 (hd=64)
                sl = slice(h * hd, (h + 1) * hd)
                s = jax.lax.dot_general(q[:, sl], k[:, sl], (((1,), (1,)), ((), ())),
                                        preferred_element_type=jnp.float32)
                s = s + mask                          # broadcast over query rows
                m_prev = m_sc[h]
                m_new = jnp.maximum(m_prev, jnp.max(s, axis=-1, keepdims=True))
                alpha = jnp.exp(m_prev - m_new)
                p = jnp.exp(s - m_new)
                l_sc[h] = alpha * l_sc[h] + jnp.sum(p, axis=-1, keepdims=True)
                acc_sc[h] = alpha * acc_sc[h] + jnp.dot(
                    p.astype(v.dtype), v[:, sl], preferred_element_type=jnp.float32)
                m_sc[h] = m_new

        if window is None:
            _compute()
        else:
            # Longformer sliding window: skip kv tiles that neither overlap the
            # +-window band around this q tile nor contain the global CLS token.
            # TODO(synk): tile-level skip only; no element-level band mask inside a tile.
            qi = pl.program_id(2)
            q_start = qi * tq
            k_start = ki * tk
            in_band = jnp.logical_and(k_start < q_start + tq + window,
                                      k_start + tk > q_start - window)
            needed = jnp.logical_or(in_band, jnp.logical_or(ki == 0, qi == 0))
            pl.when(needed)(_compute)

        @pl.when(ki == pl.num_programs(3) - 1)
        def _finalize():
            outs = []
            for h in range(hpb):
                inv_l = pl.reciprocal(l_sc[h], approx=True)   # EUP vrcp
                outs.append(acc_sc[h] * inv_l)
            out = outs[0] if hpb == 1 else jnp.concatenate(outs, axis=-1)
            o_ref[0] = out.astype(o_ref.dtype)

    return kernel


def flash_attention(qkv, add_mask, nh, window=None):
    """Flash-style online-softmax attention reading the packed QKV tensor directly.

    qkv: [B, S, 3H] bf16 (Q|K|V along the lane axis, heads packed inside each H
    segment); add_mask: [B, 1, S] f32 additive (0 valid / -1e9 pad).
    Returns [B, S, H] bf16.  Grid: (batch, head_group, q_tile, kv_tile) with kv
    as the 'arbitrary' reduction axis; the other three axes are parallel (v7x).
    NOTE: fully-padded query rows get a uniform (garbage but finite) attention
    distribution — harmless since only the CLS row is consumed downstream."""
    B, S, threeH = qkv.shape
    H = threeH // 3
    hd = H // nh
    # Group heads so each grid step sees a full 128-lane block.
    hpb = 1 if hd >= 128 else 128 // hd
    assert (hd % 128 == 0) or (128 % hd == 0), "head_dim must divide or be a multiple of 128"
    assert nh % hpb == 0
    lane = hpb * hd
    n_groups = nh // hpb

    # Lane-align the sequence (no-op when the caller already padded S to 128).
    S_pad = _round_up(S, 128)
    if S_pad != S:
        qkv = jnp.pad(qkv, ((0, 0), (0, S_pad - S), (0, 0)))
        add_mask = jnp.pad(add_mask, ((0, 0), (0, 0), (0, S_pad - S)),
                           constant_values=-1e9)

    tq = _pick_tile(S_pad, 512, 8)
    tk = _pick_tile(S_pad, 512, 128)

    out = pl.pallas_call(
        _make_flash_attn_kernel(hpb, hd, tq, tk, window),
        out_shape=jax.ShapeDtypeStruct((B, S_pad, H), qkv.dtype),
        grid=(B, n_groups, S_pad // tq, S_pad // tk),
        in_specs=[
            # Same packed qkv array three times; the last-axis block index selects
            # the Q / K / V lane slab of this head group — no XLA-level slicing.
            pl.BlockSpec((1, tq, lane), lambda b, g, qi, ki: (b, qi, g)),
            pl.BlockSpec((1, tk, lane), lambda b, g, qi, ki: (b, ki, n_groups + g)),
            pl.BlockSpec((1, tk, lane), lambda b, g, qi, ki: (b, ki, 2 * n_groups + g)),
            pl.BlockSpec((1, 1, tk), lambda b, g, qi, ki: (b, 0, ki)),
        ],
        out_specs=pl.BlockSpec((1, tq, lane), lambda b, g, qi, ki: (b, qi, g)),
        scratch_shapes=[
            pltpu.VMEM((hpb, tq, 1), jnp.float32),     # running max
            pltpu.VMEM((hpb, tq, 1), jnp.float32),     # running denominator
            pltpu.VMEM((hpb, tq, hd), jnp.float32),    # running numerator
        ],
        compiler_params=pltpu.CompilerParams(
            dimension_semantics=("parallel", "parallel", "parallel", "arbitrary")),
    )(qkv, qkv, qkv, add_mask)

    if S_pad != S:
        out = out[:, :S, :]
    return out


# ----------------------------------------------------------------------------
# Model (synthetic Longformer-style encoder + classifier head)
# ----------------------------------------------------------------------------
def init_params(key, vocab, max_pos, H, nh, ffn, n_layers, n_labels):
    scale = 0.02
    wdt = jnp.bfloat16   # MXU-native weight dtype; f32 accumulation in-kernel
    hd = H // nh
    q_scale = 1.0 / math.sqrt(hd)

    def nxt():
        nonlocal key
        key, sub = jax.random.split(key)
        return sub

    p = {
        "tok_emb": scale * jax.random.normal(nxt(), (vocab, H), jnp.float32),
        "pos_emb": scale * jax.random.normal(nxt(), (max_pos, H), jnp.float32),
        "emb_ln_g": jnp.ones((H,), jnp.float32),
        "emb_ln_b": jnp.zeros((H,), jnp.float32),
        "layers": [],
        "fc_w": scale * jax.random.normal(nxt(), (H, n_labels), jnp.float32),
        "fc_b": jnp.zeros((n_labels,), jnp.float32),
    }
    for _ in range(n_layers):
        # Fused QKV projection with the 1/sqrt(head_dim) softmax scale folded
        # into the Q columns (weights AND bias) at init time.
        w_qkv = scale * jax.random.normal(nxt(), (H, 3 * H), jnp.float32)
        w_qkv = w_qkv.at[:, :H].multiply(q_scale)
        b_qkv = jnp.zeros((3 * H,), jnp.float32).at[:H].multiply(q_scale)
        layer = {
            "w_qkv": w_qkv.astype(wdt),
            "b_qkv": b_qkv,
            "wo": (scale * jax.random.normal(nxt(), (H, H), jnp.float32)).astype(wdt),
            "bo": jnp.zeros((H,), jnp.float32),
            "ln1_g": jnp.ones((H,), jnp.float32),
            "ln1_b": jnp.zeros((H,), jnp.float32),
            "w1": (scale * jax.random.normal(nxt(), (H, ffn), jnp.float32)).astype(wdt),
            "b1": jnp.zeros((ffn,), jnp.float32),
            "w2": (scale * jax.random.normal(nxt(), (ffn, H), jnp.float32)).astype(wdt),
            "b2": jnp.zeros((H,), jnp.float32),
            "ln2_g": jnp.ones((H,), jnp.float32),
            "ln2_b": jnp.zeros((H,), jnp.float32),
        }
        p["layers"].append(layer)
    return p


def bert_classifier_forward(params, input_ids, attention_mask, nh,
                            attention_window=None):
    B, S_in = input_ids.shape
    H = params["tok_emb"].shape[1]

    # Pad the sequence to a lane-aligned (multiple of 128) length — mirrors the
    # tokenizer's padding='max_length' and keeps every kernel tile (8,128)-aligned
    # (no full-dim fallback for ragged M = B*S or ragged S).  Pad tokens carry
    # attention_mask == 0 so they never influence valid rows.
    S = _round_up(S_in, 128)
    if S != S_in:
        input_ids = jnp.pad(input_ids, ((0, 0), (0, S - S_in)))
        attention_mask = jnp.pad(attention_mask, ((0, 0), (0, S - S_in)))
    assert params["pos_emb"].shape[0] >= S

    # Embedding lookup (glue) + positional embeddings, then LayerNorm.
    x = jnp.take(params["tok_emb"], input_ids, axis=0)
    x = x + params["pos_emb"][None, :S, :]
    x2d = x.reshape(B * S, H).astype(jnp.bfloat16)
    x2d = layernorm(x2d, params["emb_ln_g"], params["emb_ln_b"])

    # Additive attention mask: 0 for valid, -1e9 for padding.  [B, 1, S]
    add_mask = ((1.0 - attention_mask.astype(jnp.float32)) * -1e9)[:, None, :]

    # TODO(synk): Longformer global+sliding-window attention is exact here only when
    # seq_len <= attention window (attention_window=None -> full attention); for long
    # sequences pass attention_window to enable the kv-tile skip.
    for lyr in params["layers"]:
        # Fused QKV projection: single bf16 matmul -> [B*S, 3H]; the packed output
        # is consumed directly by the attention kernel (no q/k/v slicing).
        qkv = linear(x2d, lyr["w_qkv"], lyr["b_qkv"])
        a = flash_attention(qkv.reshape(B, S, 3 * H), add_mask, nh,
                            window=attention_window)                  # [B, S, H]

        # Output projection with residual-add + LayerNorm fused in the epilogue.
        x2d = linear_residual_layernorm(a.reshape(B * S, H), lyr["wo"], lyr["bo"],
                                        x2d, lyr["ln1_g"], lyr["ln1_b"])

        # FFN: GELU fused into the first matmul, residual + LN into the second.
        h1 = linear(x2d, lyr["w1"], lyr["b1"], act="gelu")
        x2d = linear_residual_layernorm(h1, lyr["w2"], lyr["b2"], x2d,
                                        lyr["ln2_g"], lyr["ln2_b"])

    # bert_hidden_states[-1][:, 0, :]  -> CLS token pooling.
    cls = x2d.reshape(B, S, H)[:, 0, :].astype(jnp.float32)            # [B, H]

    # TODO(synk): nn.Dropout is a no-op at inference; omitted (identity).

    # Classifier head: num_labels (2) << 128 lanes, so this tiny matmul is left
    # to XLA instead of a degenerate masked-store kernel.
    logits = cls @ params["fc_w"] + params["fc_b"]                     # [B, num_labels]
    return jnp.squeeze(logits)                                         # matches out.squeeze()


# ----------------------------------------------------------------------------
# Demo
# ----------------------------------------------------------------------------
if __name__ == "__main__":
    # Small demo shapes (real Longformer: H=768, nh=12, hd=64, S=4096).  H/nh chosen
    # so head_dim = 128 -> one head per grid step; with hd=64 the kernel runs two
    # heads per 128-lane step automatically.
    B, S, H, NH, FFN, LAYERS, LABELS = 2, 8, 256, 2, 512, 2, 2
    VOCAB, MAX_POS = 64, 128

    key = jax.random.PRNGKey(0)
    k_params, k_ids = jax.random.split(key)

    params = init_params(k_params, VOCAB, MAX_POS, H, NH, FFN, LAYERS, LABELS)

    input_ids = jax.random.randint(k_ids, (B, S), 1, VOCAB, dtype=jnp.int32)
    input_ids = input_ids.at[:, 0].set(0)  # CLS token id
    attention_mask = jnp.ones((B, S), dtype=jnp.int32)
    attention_mask = attention_mask.at[1, S - 2:].set(0)  # pad tail of sample 1

    out = bert_classifier_forward(params, input_ids, attention_mask, NH)
    out = jax.block_until_ready(out)
    assert out.shape == (B, LABELS)
    assert bool(jnp.all(jnp.isfinite(out)))
    print("KERNEL_OK")
</pallas_src>

<mosaic_0001>
module attributes {stable_mosaic.version = 11 : i64} {
  func.func @_layernorm_kernel(%arg0: i32, %arg1: memref<256x256xbf16, #tpu.memory_space<vmem>>, %arg2: memref<1x256xf32, #tpu.memory_space<vmem>>, %arg3: memref<1x256xf32, #tpu.memory_space<vmem>>, %arg4: memref<256x256xbf16, #tpu.memory_space<vmem>>) attributes {dimension_semantics = [#tpu.dimension_semantics<parallel>], iteration_bounds = array<i64: 1>, scalar_prefetch = 0 : i64, scratch_operands = 0 : i64, tpu.core_type = #tpu.core_type<tc>, window_params = [{transform_indices = @transform_0, window_bounds = array<i64: 256, 256>}, {pipeline_mode = #tpu.pipeline_mode<synchronous>, transform_indices = @transform_1, window_bounds = array<i64: 1, 256>}, {pipeline_mode = #tpu.pipeline_mode<synchronous>, transform_indices = @transform_2, window_bounds = array<i64: 1, 256>}, {transform_indices = @transform_3, window_bounds = array<i64: 256, 256>}]} {
    %c0 = arith.constant 0 : index
    %c0_0 = arith.constant 0 : index
    %0 = vector.load %arg1[%c0, %c0_0] : memref<256x256xbf16, #tpu.memory_space<vmem>>, vector<256x256xbf16>
    %1 = arith.extf %0 : vector<256x256xbf16> to vector<256x256xf32>
    %cst = arith.constant dense<0.000000e+00> : vector<256xf32>
    %2 = vector.multi_reduction <add>, %1, %cst [1] : vector<256x256xf32> to vector<256xf32>
    %3 = vector.shape_cast %2 : vector<256xf32> to vector<256x1xf32>
    %cst_1 = arith.constant 2.560000e+02 : f32
    %4 = vector.broadcast %cst_1 : f32 to vector<256x1xf32>
    %5 = arith.divf %3, %4 : vector<256x1xf32>
    %6 = vector.broadcast %5 : vector<256x1xf32> to vector<256x256xf32>
    %7 = arith.subf %1, %6 : vector<256x256xf32>
    %8 = arith.mulf %7, %7 : vector<256x256xf32>
    %cst_2 = arith.constant dense<0.000000e+00> : vector<256xf32>
    %9 = vector.multi_reduction <add>, %8, %cst_2 [1] : vector<256x256xf32> to vector<256xf32>
    %10 = vector.shape_cast %9 : vector<256xf32> to vector<256x1xf32>
    %cst_3 = arith.constant 2.560000e+02 : f32
    %11 = vector.broadcast %cst_3 : f32 to vector<256x1xf32>
    %12 = arith.divf %10, %11 : vector<256x1xf32>
    %13 = vector.broadcast %5 : vector<256x1xf32> to vector<256x256xf32>
    %14 = arith.subf %1, %13 : vector<256x256xf32>
    %cst_4 = arith.constant 9.99999974E-6 : f32
    %15 = vector.broadcast %cst_4 : f32 to vector<256x1xf32>
    %16 = arith.addf %12, %15 : vector<256x1xf32>
    %17 = math.rsqrt %16 : vector<256x1xf32>
    %18 = vector.broadcast %17 : vector<256x1xf32> to vector<256x256xf32>
    %19 = arith.mulf %14, %18 : vector<256x256xf32>
    %c0_5 = arith.constant 0 : index
    %c0_6 = arith.constant 0 : index
    %20 = vector.load %arg2[%c0_5, %c0_6] : memref<1x256xf32, #tpu.memory_space<vmem>>, vector<1x256xf32>
    %21 = vector.broadcast %20 : vector<1x256xf32> to vector<256x256xf32>
    %22 = arith.mulf %19, %21 : vector<256x256xf32>
    %c0_7 = arith.constant 0 : index
    %c0_8 = arith.constant 0 : index
    %23 = vector.load %arg3[%c0_7, %c0_8] : memref<1x256xf32, #tpu.memory_space<vmem>>, vector<1x256xf32>
    %24 = vector.broadcast %23 : vector<1x256xf32> to vector<256x256xf32>
    %25 = arith.addf %22, %24 : vector<256x256xf32>
    %26 = arith.truncf %25 : vector<256x256xf32> to vector<256x256xbf16>
    %c0_9 = arith.constant 0 : index
    %c0_10 = arith.constant 0 : index
    %27 = vector.load %arg4[%c0_9, %c0_10] : memref<256x256xbf16, #tpu.memory_space<vmem>>, vector<256x256xbf16>
    tpu.vector_store %arg4[%c0_9, %c0_10], %26 {strides = array<i32>} : memref<256x256xbf16, #tpu.memory_space<vmem>>, vector<256x256xbf16>,
    return
  }
  func.func @transform_0(%arg0: i32) -> (i32, i32) {
    %c0_i32 = arith.constant 0 : i32
    %c0_i32_0 = arith.constant 0 : i32
    return %arg0, %c0_i32 : i32, i32
  }
  func.func @transform_1(%arg0: i32) -> (i32, i32) {
    %c0_i32 = arith.constant 0 : i32
    %c0_i32_0 = arith.constant 0 : i32
    %c0_i32_1 = arith.constant 0 : i32
    return %c0_i32, %c0_i32_0 : i32, i32
  }
  func.func @transform_2(%arg0: i32) -> (i32, i32) {
    %c0_i32 = arith.constant 0 : i32
    %c0_i32_0 = arith.constant 0 : i32
    %c0_i32_1 = arith.constant 0 : i32
    return %c0_i32, %c0_i32_0 : i32, i32
  }
  func.func @transform_3(%arg0: i32) -> (i32, i32) {
    %c0_i32 = arith.constant 0 : i32
    %c0_i32_0 = arith.constant 0 : i32
    return %arg0, %c0_i32 : i32, i32
  }
}

</mosaic_0001>

<llo_original>
// kernel: tpu_custom_call.1
$region0: #{tpu_custom_call.1}
  #allocation0 [shape = 'u32[]', space=smem, size = 0x4, offset = 0x4, fixed_abs, tag = 'smem constant byte address 0x4 - core index']
  #allocation1 [shape = 'u32[144,128]{1,0:T(1,128)}', space=vmem, size = 0x12000, scoped, tag = 'internal scratch']
  %s0 = inlined_call_operand.hbm [shape: bf16[256,256], index: 0, kind: input, shape index: {}]
  %s1 = inlined_call_operand.vmem [shape: f32[1,256], index: 1, kind: input, shape index: {}]
  %s2 = inlined_call_operand.vmem [shape: f32[1,256], index: 2, kind: input, shape index: {}]
  %s3 = inlined_call_operand.hbm [shape: bf16[256,256], index: 3, kind: output, shape index: {}]
  %s4 = sld [smem:[#allocation0]]
  $region26: #{tpu_custom_call.1} parent=0
    _
  %s6 = ssub.s32 1, %s4
  %s7 = scalar_select 0, %s6, %s4
  $region1: #{tpu_custom_call.1} parent=0
    #allocation2 [shape = 'u8[131072]{0}', space=vmem, size = 0x20000, scoped, tag = 'input window, operand 0, single buffered']
    #allocation3 [shape = 's32[1]{0}', space=sflag, size = 0x4, scoped, tag = 'scoped memory for tpu_custom_call.1']
    #allocation4 [shape = 's32[1]{0}', space=sflag, size = 0x4, scoped, tag = 'scoped memory for tpu_custom_call.1']
    #allocation5 [shape = 'u8[131072]{0}', space=vmem, size = 0x20000, scoped, tag = 'output window, operand 0, single buffered']
    %8 = vsyncpa [#allocation3], 0
    %9 = vsyncpa [#allocation4], 0
    // Predicated region
    $region2: #{tpu_custom_call.1} parent=1 // pred_check
      _
    $region3: #{tpu_custom_call.1} parent=1 // pred_check_branch
      %11 = sbr.rel (0) target = $region5
    $region4: #{tpu_custom_call.1} parent=1 // pred_region
      %s13 = ssub.s32 4096, 4096
      %14 = vsyncadd [#allocation3], %s13
      %s15 = sshll.u32 [#allocation2], 4
      %s16 = int_to_ptr.vmem [resolvable:$true] %s15
      %21 = dma.hbm_to_vmem [thread:$0]  %s0, 4096, %s16, [#allocation3], 128, 128, 8
    $region5: #{tpu_custom_call.1} parent=1 // pred_fallthru
      _
    // Predicated region
    $region6: #{tpu_custom_call.1} parent=1 // pred_check
      _
    $region7: #{tpu_custom_call.1} parent=1 // pred_check_branch
      %23 = sbr.rel (0) target = $region9
    $region8: #{tpu_custom_call.1} parent=1 // pred_region
      _
    $region9: #{tpu_custom_call.1} parent=1 // pred_fallthru
      _
    // Predicated region
    $region10: #{tpu_custom_call.1} parent=1 // pred_check
      _
    $region11: #{tpu_custom_call.1} parent=1 // pred_check_branch
      %25 = sbr.rel (0) target = $region13
    $region12: #{tpu_custom_call.1} parent=1 // pred_region
      _
    $region13: #{tpu_custom_call.1} parent=1 // pred_fallthru
      _
    // Predicated region
    $region14: #{tpu_custom_call.1} parent=1 // pred_check
      _
    $region15: #{tpu_custom_call.1} parent=1 // pred_check_branch
      %27 = sbr.rel (0) target = $region17
    $region16: #{tpu_custom_call.1} parent=1 // pred_region
      %28 = dma.done [#allocation3], 4096
    $region17: #{tpu_custom_call.1} parent=1 // pred_fallthru
      _
    %v29 = vld [vmem:[#allocation2] sm:$0xff]
    %v30 = vld [vmem:[#allocation2 + $0x8] sm:$0xff]
    %v31 = vld [vmem:[#allocation2 + $0x10] sm:$0xff]
    %v32 = vld [vmem:[#allocation2 + $0x18] sm:$0xff]
    %v33 = vld [vmem:[#allocation2 + $0x20] sm:$0xff]
    %v34 = vld [vmem:[#allocation2 + $0x28] sm:$0xff]
    %v35 = vld [vmem:[#allocation2 + $0x30] sm:$0xff]
    %v36 = vld [vmem:[#allocation2 + $0x38] sm:$0xff]
    %v37 = vld [vmem:[#allocation2 + $0x40] sm:$0xff]
    %v38 = vld [vmem:[#allocation2 + $0x48] sm:$0xff]
    %v39 = vld [vmem:[#allocation2 + $0x50] sm:$0xff]
    %v40 = vld [vmem:[#allocation2 + $0x58] sm:$0xff]
    %v41 = vld [vmem:[#allocation2 + $0x60] sm:$0xff]
    %v42 = vld [vmem:[#allocation2 + $0x68] sm:$0xff]
    %v43 = vld [vmem:[#allocation2 + $0x70] sm:$0xff]
    %v44 = vld [vmem:[#allocation2 + $0x78] sm:$0xff]
    %v45 = vld [vmem:[#allocation2 + $0x80] sm:$0xff]
    %v46 = vld [vmem:[#allocation2 + $0x88] sm:$0xff]
    %v47 = vld [vmem:[#allocation2 + $0x90] sm:$0xff]
    %v48 = vld [vmem:[#allocation2 + $0x98] sm:$0xff]
    %v49 = vld [vmem:[#allocation2 + $0xa0] sm:$0xff]
    %v50 = vld [vmem:[#allocation2 + $0xa8] sm:$0xff]
    %v51 = vld [vmem:[#allocation2 + $0xb0] sm:$0xff]
    %v52 = vld [vmem:[#allocation2 + $0xb8] sm:$0xff]
    %v53 = vld [vmem:[#allocation2 + $0xc0] sm:$0xff]
    %v54 = vld [vmem:[#allocation2 + $0xc8] sm:$0xff]
    %v55 = vld [vmem:[#allocation2 + $0xd0] sm:$0xff]
    %v56 = vld [vmem:[#allocation2 + $0xd8] sm:$0xff]
    %v57 = vld [vmem:[#allocation2 + $0xe0] sm:$0xff]
    %v58 = vld [vmem:[#allocation2 + $0xe8] sm:$0xff]
    %v59 = vld [vmem:[#allocation2 + $0xf0] sm:$0xff]
    %v60 = vld [vmem:[#allocation2 + $0xf8] sm:$0xff]
    %v61 = vunpack.c.l.bf16 %v29
    %v62 = vunpack.c.h.bf16 %v29
    %v63 = vunpack.c.l.bf16 %v30
    %v64 = vunpack.c.h.bf16 %v30
    %v65 = vunpack.c.l.bf16 %v31
    %v66 = vunpack.c.h.bf16 %v31
    %v67 = vunpack.c.l.bf16 %v32
    %v68 = vunpack.c.h.bf16 %v32
    %v69 = vunpack.c.l.bf16 %v33
    %v70 = vunpack.c.h.bf16 %v33
    %v71 = vunpack.c.l.bf16 %v34
    %v72 = vunpack.c.h.bf16 %v34
    %v73 = vunpack.c.l.bf16 %v35
    %v74 = vunpack.c.h.bf16 %v35
    %v75 = vunpack.c.l.bf16 %v36
    %v76 = vunpack.c.h.bf16 %v36
    %v77 = vunpack.c.l.bf16 %v37
    %v78 = vunpack.c.h.bf16 %v37
    %v79 = vunpack.c.l.bf16 %v38
    %v80 = vunpack.c.h.bf16 %v38
    %v81 = vunpack.c.l.bf16 %v39
    %v82 = vunpack.c.h.bf16 %v39
    %v83 = vunpack.c.l.bf16 %v40
    %v84 = vunpack.c.h.bf16 %v40
    %v85 = vunpack.c.l.bf16 %v41
    %v86 = vunpack.c.h.bf16 %v41
    %v87 = vunpack.c.l.bf16 %v42
    %v88 = vunpack.c.h.bf16 %v42
    %v89 = vunpack.c.l.bf16 %v43
    %v90 = vunpack.c.h.bf16 %v43
    %v91 = vunpack.c.l.bf16 %v44
    %v92 = vunpack.c.h.bf16 %v44
    %v93 = vunpack.c.l.bf16 %v45
    %v94 = vunpack.c.h.bf16 %v45
    %v95 = vunpack.c.l.bf16 %v46
    %v96 = vunpack.c.h.bf16 %v46
    %v97 = vunpack.c.l.bf16 %v47
    %v98 = vunpack.c.h.bf16 %v47
    %v99 = vunpack.c.l.bf16 %v48
    %v100 = vunpack.c.h.bf16 %v48
    %v101 = vunpack.c.l.bf16 %v49
    %v102 = vunpack.c.h.bf16 %v49
    %v103 = vunpack.c.l.bf16 %v50
    %v104 = vunpack.c.h.bf16 %v50
    %v105 = vunpack.c.l.bf16 %v51
    %v106 = vunpack.c.h.bf16 %v51
    %v107 = vunpack.c.l.bf16 %v52
    %v108 = vunpack.c.h.bf16 %v52
    %v109 = vunpack.c.l.bf16 %v53
    %v110 = vunpack.c.h.bf16 %v53
    %v111 = vunpack.c.l.bf16 %v54
    %v112 = vunpack.c.h.bf16 %v54
    %v113 = vunpack.c.l.bf16 %v55
    %v114 = vunpack.c.h.bf16 %v55
    %v115 = vunpack.c.l.bf16 %v56
    %v116 = vunpack.c.h.bf16 %v56
    %v117 = vunpack.c.l.bf16 %v57
    %v118 = vunpack.c.h.bf16 %v57
    %v119 = vunpack.c.l.bf16 %v58
    %v120 = vunpack.c.h.bf16 %v58
    %v121 = vunpack.c.l.bf16 %v59
    %v122 = vunpack.c.h.bf16 %v59
    %v123 = vunpack.c.l.bf16 %v60
    %v124 = vunpack.c.h.bf16 %v60
    %v125 = vadd.f32 %v61, %v62
    %126 = vadd.xlane.f32.xlu0 %v125
    %v127 = vpop.xlane.xlu0 %126
    %v128 = vadd.f32 %v63, %v64
    %129 = vadd.xlane.f32.xlu0 %v128
    %v130 = vpop.xlane.xlu0 %129
    %v131 = vadd.f32 %v65, %v66
    %132 = vadd.xlane.f32.xlu0 %v131
    %v133 = vpop.xlane.xlu0 %132
    %v134 = vadd.f32 %v67, %v68
    %135 = vadd.xlane.f32.xlu0 %v134
    %v136 = vpop.xlane.xlu0 %135
    %v137 = vadd.f32 %v69, %v70
    %138 = vadd.xlane.f32.xlu0 %v137
    %v139 = vpop.xlane.xlu0 %138
    %v140 = vadd.f32 %v71, %v72
    %141 = vadd.xlane.f32.xlu0 %v140
    %v142 = vpop.xlane.xlu0 %141
    %v143 = vadd.f32 %v73, %v74
    %144 = vadd.xlane.f32.xlu0 %v143
    %v145 = vpop.xlane.xlu0 %144
    %v146 = vadd.f32 %v75, %v76
    %147 = vadd.xlane.f32.xlu0 %v146
    %v148 = vpop.xlane.xlu0 %147
    %v149 = vadd.f32 %v77, %v78
    %150 = vadd.xlane.f32.xlu0 %v149
    %v151 = vpop.xlane.xlu0 %150
    %v152 = vadd.f32 %v79, %v80
    %153 = vadd.xlane.f32.xlu0 %v152
    %v154 = vpop.xlane.xlu0 %153
    %v155 = vadd.f32 %v81, %v82
    %156 = vadd.xlane.f32.xlu0 %v155
    %v157 = vpop.xlane.xlu0 %156
    %v158 = vadd.f32 %v83, %v84
    %159 = vadd.xlane.f32.xlu0 %v158
    %v160 = vpop.xlane.xlu0 %159
    %v161 = vadd.f32 %v85, %v86
    %162 = vadd.xlane.f32.xlu0 %v161
    %v163 = vpop.xlane.xlu0 %162
    %v164 = vadd.f32 %v87, %v88
    %165 = vadd.xlane.f32.xlu0 %v164
    %v166 = vpop.xlane.xlu0 %165
    %v167 = vadd.f32 %v89, %v90
    %168 = vadd.xlane.f32.xlu0 %v167
    %v169 = vpop.xlane.xlu0 %168
    %v170 = vadd.f32 %v91, %v92
    %171 = vadd.xlane.f32.xlu0 %v170
    %v172 = vpop.xlane.xlu0 %171
    %v173 = vadd.f32 %v93, %v94
    %174 = vadd.xlane.f32.xlu0 %v173
    %v175 = vpop.xlane.xlu0 %174
    %v176 = vadd.f32 %v95, %v96
    %177 = vadd.xlane.f32.xlu0 %v176
    %v178 = vpop.xlane.xlu0 %177
    %v179 = vadd.f32 %v97, %v98
    %180 = vadd.xlane.f32.xlu0 %v179
    %v181 = vpop.xlane.xlu0 %180
    %v182 = vadd.f32 %v99, %v100
    %183 = vadd.xlane.f32.xlu0 %v182
    %v184 = vpop.xlane.xlu0 %183
    %v185 = vadd.f32 %v101, %v102
    %186 = vadd.xlane.f32.xlu0 %v185
    %v187 = vpop.xlane.xlu0 %186
    %v188 = vadd.f32 %v103, %v104
    %189 = vadd.xlane.f32.xlu0 %v188
    %v190 = vpop.xlane.xlu0 %189
    %v191 = vadd.f32 %v105, %v106
    %192 = vadd.xlane.f32.xlu0 %v191
    %v193 = vpop.xlane.xlu0 %192
    %v194 = vadd.f32 %v107, %v108
    %195 = vadd.xlane.f32.xlu0 %v194
    %v196 = vpop.xlane.xlu0 %195
    %v197 = vadd.f32 %v109, %v110
    %198 = vadd.xlane.f32.xlu0 %v197
    %v199 = vpop.xlane.xlu0 %198
    %v200 = vadd.f32 %v111, %v112
    %201 = vadd.xlane.f32.xlu0 %v200
    %v202 = vpop.xlane.xlu0 %201
    %v203 = vadd.f32 %v113, %v114
    %204 = vadd.xlane.f32.xlu0 %v203
    %v205 = vpop.xlane.xlu0 %204
    %v206 = vadd.f32 %v115, %v116
    %207 = vadd.xlane.f32.xlu0 %v206
    %v208 = vpop.xlane.xlu0 %207
    %v209 = vadd.f32 %v117, %v118
    %210 = vadd.xlane.f32.xlu0 %v209
    %v211 = vpop.xlane.xlu0 %210
    %v212 = vadd.f32 %v119, %v120
    %213 = vadd.xlane.f32.xlu0 %v212
    %v214 = vpop.xlane.xlu0 %213
    %v215 = vadd.f32 %v121, %v122
    %216 = vadd.xlane.f32.xlu0 %v215
    %v217 = vpop.xlane.xlu0 %216
    %v218 = vadd.f32 %v123, %v124
    %219 = vadd.xlane.f32.xlu0 %v218
    %v220 = vpop.xlane.xlu0 %219
    %v221 = vrcp.pop 256.0
    %v222 = vmul.f32 %v127, %v221
    %v223 = vmul.f32 %v130, %v221
    %v224 = vmul.f32 %v133, %v221
    %v225 = vmul.f32 %v136, %v221
    %v226 = vmul.f32 %v139, %v221
    %v227 = vmul.f32 %v142, %v221
    %v228 = vmul.f32 %v145, %v221
    %v229 = vmul.f32 %v148, %v221
    %v230 = vmul.f32 %v151, %v221
    %v231 = vmul.f32 %v154, %v221
    %v232 = vmul.f32 %v157, %v221
    %v233 = vmul.f32 %v160, %v221
    %v234 = vmul.f32 %v163, %v221
    %v235 = vmul.f32 %v166, %v221
    %v236 = vmul.f32 %v169, %v221
    %v237 = vmul.f32 %v172, %v221
    %v238 = vmul.f32 %v175, %v221
    %v239 = vmul.f32 %v178, %v221
    %v240 = vmul.f32 %v181, %v221
    %v241 = vmul.f32 %v184, %v221
    %v242 = vmul.f32 %v187, %v221
    %v243 = vmul.f32 %v190, %v221
    %v244 = vmul.f32 %v193, %v221
    %v245 = vmul.f32 %v196, %v221
    %v246 = vmul.f32 %v199, %v221
    %v247 = vmul.f32 %v202, %v221
    %v248 = vmul.f32 %v205, %v221
    %v249 = vmul.f32 %v208, %v221
    %v250 = vmul.f32 %v211, %v221
    %v251 = vmul.f32 %v214, %v221
    %v252 = vmul.f32 %v217, %v221
    %v253 = vmul.f32 %v220, %v221
    %v254 = vsub.f32 %v61, %v222
    %v255 = vsub.f32 %v62, %v222
    %v256 = vsub.f32 %v63, %v223
    %v257 = vsub.f32 %v64, %v223
    %v258 = vsub.f32 %v65, %v224
    %v259 = vsub.f32 %v66, %v224
    %v260 = vsub.f32 %v67, %v225
    %v261 = vsub.f32 %v68, %v225
    %v262 = vsub.f32 %v69, %v226
    %v263 = vsub.f32 %v70, %v226
    %v264 = vsub.f32 %v71, %v227
    %v265 = vsub.f32 %v72, %v227
    %v266 = vsub.f32 %v73, %v228
    %v267 = vsub.f32 %v74, %v228
    %v268 = vsub.f32 %v75, %v229
    %v269 = vsub.f32 %v76, %v229
    %v270 = vsub.f32 %v77, %v230
    %v271 = vsub.f32 %v78, %v230
    %v272 = vsub.f32 %v79, %v231
    %v273 = vsub.f32 %v80, %v231
    %v274 = vsub.f32 %v81, %v232
    %v275 = vsub.f32 %v82, %v232
    %v276 = vsub.f32 %v83, %v233
    %v277 = vsub.f32 %v84, %v233
    %v278 = vsub.f32 %v85, %v234
    %v279 = vsub.f32 %v86, %v234
    %v280 = vsub.f32 %v87, %v235
    %v281 = vsub.f32 %v88, %v235
    %v282 = vsub.f32 %v89, %v236
    %v283 = vsub.f32 %v90, %v236
    %v284 = vsub.f32 %v91, %v237
    %v285 = vsub.f32 %v92, %v237
    %v286 = vsub.f32 %v93, %v238
    %v287 = vsub.f32 %v94, %v238
    %v288 = vsub.f32 %v95, %v239
    %v289 = vsub.f32 %v96, %v239
    %v290 = vsub.f32 %v97, %v240
    %v291 = vsub.f32 %v98, %v240
    %v292 = vsub.f32 %v99, %v241
    %v293 = vsub.f32 %v100, %v241
    %v294 = vsub.f32 %v101, %v242
    %v295 = vsub.f32 %v102, %v242
    %v296 = vsub.f32 %v103, %v243
    %v297 = vsub.f32 %v104, %v243
    %v298 = vsub.f32 %v105, %v244
    %v299 = vsub.f32 %v106, %v244
    %v300 = vsub.f32 %v107, %v245
    %v301 = vsub.f32 %v108, %v245
    %v302 = vsub.f32 %v109, %v246
    %v303 = vsub.f32 %v110, %v246
    %v304 = vsub.f32 %v111, %v247
    %v305 = vsub.f32 %v112, %v247
    %v306 = vsub.f32 %v113, %v248
    %v307 = vsub.f32 %v114, %v248
    %v308 = vsub.f32 %v115, %v249
    %v309 = vsub.f32 %v116, %v249
    %v310 = vsub.f32 %v117, %v250
    %v311 = vsub.f32 %v118, %v250
    %v312 = vsub.f32 %v119, %v251
    %v313 = vsub.f32 %v120, %v251
    %v314 = vsub.f32 %v121, %v252
    %v315 = vsub.f32 %v122, %v252
    %v316 = vsub.f32 %v123, %v253
    %v317 = vsub.f32 %v124, %v253
    %v318 = vmul.f32 %v254, %v254
    %v319 = vmul.f32 %v255, %v255
    %v320 = vmul.f32 %v256, %v256
    %v321 = vmul.f32 %v257, %v257
    %v322 = vmul.f32 %v258, %v258
    %v323 = vmul.f32 %v259, %v259
    %v324 = vmul.f32 %v260, %v260
    %v325 = vmul.f32 %v261, %v261
    %v326 = vmul.f32 %v262, %v262
    %v327 = vmul.f32 %v263, %v263
    %v328 = vmul.f32 %v264, %v264
    %v329 = vmul.f32 %v265, %v265
    %v330 = vmul.f32 %v266, %v266
    %v331 = vmul.f32 %v267, %v267
    %v332 = vmul.f32 %v268, %v268
    %v333 = vmul.f32 %v269, %v269
    %v334 = vmul.f32 %v270, %v270
    %v335 = vmul.f32 %v271, %v271
    %v336 = vmul.f32 %v272, %v272
    %v337 = vmul.f32 %v273, %v273
    %v338 = vmul.f32 %v274, %v274
    %v339 = vmul.f32 %v275, %v275
    %v340 = vmul.f32 %v276, %v276
    %v341 = vmul.f32 %v277, %v277
    %v342 = vmul.f32 %v278, %v278
    %v343 = vmul.f32 %v279, %v279
    %v344 = vmul.f32 %v280, %v280
    %v345 = vmul.f32 %v281, %v281
    %v346 = vmul.f32 %v282, %v282
    %v347 = vmul.f32 %v283, %v283
    %v348 = vmul.f32 %v284, %v284
    %v349 = vmul.f32 %v285, %v285
    %v350 = vmul.f32 %v286, %v286
    %v351 = vmul.f32 %v287, %v287
    %v352 = vmul.f32 %v288, %v288
    %v353 = vmul.f32 %v289, %v289
    %v354 = vmul.f32 %v290, %v290
    %v355 = vmul.f32 %v291, %v291
    %v356 = vmul.f32 %v292, %v292
    %v357 = vmul.f32 %v293, %v293
    %v358 = vmul.f32 %v294, %v294
    %v359 = vmul.f32 %v295, %v295
    %v360 = vmul.f32 %v296, %v296
    %v361 = vmul.f32 %v297, %v297
    %v362 = vmul.f32 %v298, %v298
    %v363 = vmul.f32 %v299, %v299
    %v364 = vmul.f32 %v300, %v300
    %v365 = vmul.f32 %v301, %v301
    %v366 = vmul.f32 %v302, %v302
    %v367 = vmul.f32 %v303, %v303
    %v368 = vmul.f32 %v304, %v304
    %v369 = vmul.f32 %v305, %v305
    %v370 = vmul.f32 %v306, %v306
    %v371 = vmul.f32 %v307, %v307
    %v372 = vmul.f32 %v308, %v308
    %v373 = vmul.f32 %v309, %v309
    %v374 = vmul.f32 %v310, %v310
    %v375 = vmul.f32 %v311, %v311
    %v376 = vmul.f32 %v312, %v312
    %v377 = vmul.f32 %v313, %v313
    %v378 = vmul.f32 %v314, %v314
    %v379 = vmul.f32 %v315, %v315
    %v380 = vmul.f32 %v316, %v316
    %v381 = vmul.f32 %v317, %v317
    %v382 = vadd.f32 %v318, %v319
    %383 = vadd.xlane.f32.xlu0 %v382
    %v384 = vpop.xlane.xlu0 %383
    %v385 = vadd.f32 %v320, %v321
    %386 = vadd.xlane.f32.xlu0 %v385
    %v387 = vpop.xlane.xlu0 %386
    %v388 = vadd.f32 %v322, %v323
    %389 = vadd.xlane.f32.xlu0 %v388
    %v390 = vpop.xlane.xlu0 %389
    %v391 = vadd.f32 %v324, %v325
    %392 = vadd.xlane.f32.xlu0 %v391
    %v393 = vpop.xlane.xlu0 %392
    %v394 = vadd.f32 %v326, %v327
    %395 = vadd.xlane.f32.xlu0 %v394
    %v396 = vpop.xlane.xlu0 %395
    %v397 = vadd.f32 %v328, %v329
    %398 = vadd.xlane.f32.xlu0 %v397
    %v399 = vpop.xlane.xlu0 %398
    %v400 = vadd.f32 %v330, %v331
    %401 = vadd.xlane.f32.xlu0 %v400
    %v402 = vpop.xlane.xlu0 %401
    %v403 = vadd.f32 %v332, %v333
    %404 = vadd.xlane.f32.xlu0 %v403
    %v405 = vpop.xlane.xlu0 %404
    %v406 = vadd.f32 %v334, %v335
    %407 = vadd.xlane.f32.xlu0 %v406
    %v408 = vpop.xlane.xlu0 %407
    %v409 = vadd.f32 %v336, %v337
    %410 = vadd.xlane.f32.xlu0 %v409
    %v411 = vpop.xlane.xlu0 %410
    %v412 = vadd.f32 %v338, %v339
    %413 = vadd.xlane.f32.xlu0 %v412
    %v414 = vpop.xlane.xlu0 %413
    %v415 = vadd.f32 %v340, %v341
    %416 = vadd.xlane.f32.xlu0 %v415
    %v417 = vpop.xlane.xlu0 %416
    %v418 = vadd.f32 %v342, %v343
    %419 = vadd.xlane.f32.xlu0 %v418
    %v420 = vpop.xlane.xlu0 %419
    %v421 = vadd.f32 %v344, %v345
    %422 = vadd.xlane.f32.xlu0 %v421
    %v423 = vpop.xlane.xlu0 %422
    %v424 = vadd.f32 %v346, %v347
    %425 = vadd.xlane.f32.xlu0 %v424
    %v426 = vpop.xlane.xlu0 %425
    %v427 = vadd.f32 %v348, %v349
    %428 = vadd.xlane.f32.xlu0 %v427
    %v429 = vpop.xlane.xlu0 %428
    %v430 = vadd.f32 %v350, %v351
    %431 = vadd.xlane.f32.xlu0 %v430
    %v432 = vpop.xlane.xlu0 %431
    %v433 = vadd.f32 %v352, %v353
    %434 = vadd.xlane.f32.xlu0 %v433
    %v435 = vpop.xlane.xlu0 %434
    %v436 = vadd.f32 %v354, %v355
    %437 = vadd.xlane.f32.xlu0 %v436
    %v438 = vpop.xlane.xlu0 %437
    %v439 = vadd.f32 %v356, %v357
    %440 = vadd.xlane.f32.xlu0 %v439
    %v441 = vpop.xlane.xlu0 %440
    %v442 = vadd.f32 %v358, %v359
    %443 = vadd.xlane.f32.xlu0 %v442
    %v444 = vpop.xlane.xlu0 %443
    %v445 = vadd.f32 %v360, %v361
    %446 = vadd.xlane.f32.xlu0 %v445
    %v447 = vpop.xlane.xlu0 %446
    %v448 = vadd.f32 %v362, %v363
    %449 = vadd.xlane.f32.xlu0 %v448
    %v450 = vpop.xlane.xlu0 %449
    %v451 = vadd.f32 %v364, %v365
    %452 = vadd.xlane.f32.xlu0 %v451
    %v453 = vpop.xlane.xlu0 %452
    %v454 = vadd.f32 %v366, %v367
    %455 = vadd.xlane.f32.xlu0 %v454
    %v456 = vpop.xlane.xlu0 %455
    %v457 = vadd.f32 %v368, %v369
    %458 = vadd.xlane.f32.xlu0 %v457
    %v459 = vpop.xlane.xlu0 %458
    %v460 = vadd.f32 %v370, %v371
    %461 = vadd.xlane.f32.xlu0 %v460
    %v462 = vpop.xlane.xlu0 %461
    %v463 = vadd.f32 %v372, %v373
    %464 = vadd.xlane.f32.xlu0 %v463
    %v465 = vpop.xlane.xlu0 %464
    %v466 = vadd.f32 %v374, %v375
    %467 = vadd.xlane.f32.xlu0 %v466
    %v468 = vpop.xlane.xlu0 %467
    %v469 = vadd.f32 %v376, %v377
    %470 = vadd.xlane.f32.xlu0 %v469
    %v471 = vpop.xlane.xlu0 %470
    %v472 = vadd.f32 %v378, %v379
    %473 = vadd.xlane.f32.xlu0 %v472
    %v474 = vpop.xlane.xlu0 %473
    %v475 = vadd.f32 %v380, %v381
    %476 = vadd.xlane.f32.xlu0 %v475
    %v477 = vpop.xlane.xlu0 %476
    %v478 = vmul.f32 %v384, %v221
    %v479 = vmul.f32 %v387, %v221
    %v480 = vmul.f32 %v390, %v221
    %v481 = vmul.f32 %v393, %v221
    %v482 = vmul.f32 %v396, %v221
    %v483 = vmul.f32 %v399, %v221
    %v484 = vmul.f32 %v402, %v221
    %v485 = vmul.f32 %v405, %v221
    %v486 = vmul.f32 %v408, %v221
    %v487 = vmul.f32 %v411, %v221
    %v488 = vmul.f32 %v414, %v221
    %v489 = vmul.f32 %v417, %v221
    %v490 = vmul.f32 %v420, %v221
    %v491 = vmul.f32 %v423, %v221
    %v492 = vmul.f32 %v426, %v221
    %v493 = vmul.f32 %v429, %v221
    %v494 = vmul.f32 %v432, %v221
    %v495 = vmul.f32 %v435, %v221
    %v496 = vmul.f32 %v438, %v221
    %v497 = vmul.f32 %v441, %v221
    %v498 = vmul.f32 %v444, %v221
    %v499 = vmul.f32 %v447, %v221
    %v500 = vmul.f32 %v450, %v221
    %v501 = vmul.f32 %v453, %v221
    %v502 = vmul.f32 %v456, %v221
    %v503 = vmul.f32 %v459, %v221
    %v504 = vmul.f32 %v462, %v221
    %v505 = vmul.f32 %v465, %v221
    %v506 = vmul.f32 %v468, %v221
    %v507 = vmul.f32 %v471, %v221
    %v508 = vmul.f32 %v474, %v221
    %v509 = vmul.f32 %v477, %v221
    %v510 = vadd.f32 %v478, 1e-05
    %v511 = vadd.f32 %v479, 1e-05
    %v512 = vadd.f32 %v480, 1e-05
    %v513 = vadd.f32 %v481, 1e-05
    %v514 = vadd.f32 %v482, 1e-05
    %v515 = vadd.f32 %v483, 1e-05
    %v516 = vadd.f32 %v484, 1e-05
    %v517 = vadd.f32 %v485, 1e-05
    %v518 = vadd.f32 %v486, 1e-05
    %v519 = vadd.f32 %v487, 1e-05
    %v520 = vadd.f32 %v488, 1e-05
    %v521 = vadd.f32 %v489, 1e-05
    %v522 = vadd.f32 %v490, 1e-05
    %v523 = vadd.f32 %v491, 1e-05
    %v524 = vadd.f32 %v492, 1e-05
    %v525 = vadd.f32 %v493, 1e-05
    %v526 = vadd.f32 %v494, 1e-05
    %v527 = vadd.f32 %v495, 1e-05
    %v528 = vadd.f32 %v496, 1e-05
    %v529 = vadd.f32 %v497, 1e-05
    %v530 = vadd.f32 %v498, 1e-05
    %v531 = vadd.f32 %v499, 1e-05
    %v532 = vadd.f32 %v500, 1e-05
    %v533 = vadd.f32 %v501, 1e-05
    %v534 = vadd.f32 %v502, 1e-05
    %v535 = vadd.f32 %v503, 1e-05
    %v536 = vadd.f32 %v504, 1e-05
    %v537 = vadd.f32 %v505, 1e-05
    %v538 = vadd.f32 %v506, 1e-05
    %v539 = vadd.f32 %v507, 1e-05
    %v540 = vadd.f32 %v508, 1e-05
    %v541 = vadd.f32 %v509, 1e-05
    %v542 = vrsqrt.pop %v510
    %v543 = vrsqrt.pop %v511
    %v544 = vrsqrt.pop %v512
    %v545 = vrsqrt.pop %v513
    %v546 = vrsqrt.pop %v514
    %v547 = vrsqrt.pop %v515
    %v548 = vrsqrt.pop %v516
    %v549 = vrsqrt.pop %v517
    %v550 = vrsqrt.pop %v518
    %v551 = vrsqrt.pop %v519
    %v552 = vrsqrt.pop %v520
    %v553 = vrsqrt.pop %v521
    %v554 = vrsqrt.pop %v522
    %v555 = vrsqrt.pop %v523
    %v556 = vrsqrt.pop %v524
    %v557 = vrsqrt.pop %v525
    %v558 = vrsqrt.pop %v526
    %v559 = vrsqrt.pop %v527
    %v560 = vrsqrt.pop %v528
    %v561 = vrsqrt.pop %v529
    %v562 = vrsqrt.pop %v530
    %v563 = vrsqrt.pop %v531
    %v564 = vrsqrt.pop %v532
    %v565 = vrsqrt.pop %v533
    %v566 = vrsqrt.pop %v534
    %v567 = vrsqrt.pop %v535
    %v568 = vrsqrt.pop %v536
    %v569 = vrsqrt.pop %v537
    %v570 = vrsqrt.pop %v538
    %v571 = vrsqrt.pop %v539
    %v572 = vrsqrt.pop %v540
    %v573 = vrsqrt.pop %v541
    %v574 = vmul.f32 %v254, %v542
    %v575 = vmul.f32 %v255, %v542
    %v576 = vmul.f32 %v256, %v543
    %v577 = vmul.f32 %v257, %v543
    %v578 = vmul.f32 %v258, %v544
    %v579 = vmul.f32 %v259, %v544
    %v580 = vmul.f32 %v260, %v545
    %v581 = vmul.f32 %v261, %v545
    %v582 = vmul.f32 %v262, %v546
    %v583 = vmul.f32 %v263, %v546
    %v584 = vmul.f32 %v264, %v547
    %v585 = vmul.f32 %v265, %v547
    %v586 = vmul.f32 %v266, %v548
    %v587 = vmul.f32 %v267, %v548
    %v588 = vmul.f32 %v268, %v549
    %v589 = vmul.f32 %v269, %v549
    %v590 = vmul.f32 %v270, %v550
    %v591 = vmul.f32 %v271, %v550
    %v592 = vmul.f32 %v272, %v551
    %v593 = vmul.f32 %v273, %v551
    %v594 = vmul.f32 %v274, %v552
    %v595 = vmul.f32 %v275, %v552
    %v596 = vmul.f32 %v276, %v553
    %v597 = vmul.f32 %v277, %v553
    %v598 = vmul.f32 %v278, %v554
    %v599 = vmul.f32 %v279, %v554
    %v600 = vmul.f32 %v280, %v555
    %v601 = vmul.f32 %v281, %v555
    %v602 = vmul.f32 %v282, %v556
    %v603 = vmul.f32 %v283, %v556
    %v604 = vmul.f32 %v284, %v557
    %v605 = vmul.f32 %v285, %v557
    %v606 = vmul.f32 %v286, %v558
    %v607 = vmul.f32 %v287, %v558
    %v608 = vmul.f32 %v288, %v559
    %v609 = vmul.f32 %v289, %v559
    %v610 = vmul.f32 %v290, %v560
    %v611 = vmul.f32 %v291, %v560
    %v612 = vmul.f32 %v292, %v561
    %v613 = vmul.f32 %v293, %v561
    %v614 = vmul.f32 %v294, %v562
    %v615 = vmul.f32 %v295, %v562
    %v616 = vmul.f32 %v296, %v563
    %v617 = vmul.f32 %v297, %v563
    %v618 = vmul.f32 %v298, %v564
    %v619 = vmul.f32 %v299, %v564
    %v620 = vmul.f32 %v300, %v565
    %v621 = vmul.f32 %v301, %v565
    %v622 = vmul.f32 %v302, %v566
    %v623 = vmul.f32 %v303, %v566
    %v624 = vmul.f32 %v304, %v567
    %v625 = vmul.f32 %v305, %v567
    %v626 = vmul.f32 %v306, %v568
    %v627 = vmul.f32 %v307, %v568
    %v628 = vmul.f32 %v308, %v569
    %v629 = vmul.f32 %v309, %v569
    %v630 = vmul.f32 %v310, %v570
    %v631 = vmul.f32 %v311, %v570
    %v632 = vmul.f32 %v312, %v571
    %v633 = vmul.f32 %v313, %v571
    %v634 = vmul.f32 %v314, %v572
    %v635 = vmul.f32 %v315, %v572
    %v636 = vmul.f32 %v316, %v573
    %v637 = vmul.f32 %v317, %v573
    %v638 = vld [vmem:[%s1] sm:$0x3]
    %v640 = vlaneseq
    %v641 = vshrl.u32 %v640, 7
    %v642 = vsub.s32 0, %v641
    %v643 = vrot.slane %v638, %v642
    %v644 = vlaneseq
    %v645 = vshrl.u32 %v644, 7
    %v646 = vsub.s32 1, %v645
    %v647 = vrot.slane %v638, %v646
    %v650 = vmul.f32 %v574, %v643
    %v651 = vmul.f32 %v575, %v647
    %v652 = vmul.f32 %v576, %v643
    %v653 = vmul.f32 %v577, %v647
    %v654 = vmul.f32 %v578, %v643
    %v655 = vmul.f32 %v579, %v647
    %v656 = vmul.f32 %v580, %v643
    %v657 = vmul.f32 %v581, %v647
    %v658 = vmul.f32 %v582, %v643
    %v659 = vmul.f32 %v583, %v647
    %v660 = vmul.f32 %v584, %v643
    %v661 = vmul.f32 %v585, %v647
    %v662 = vmul.f32 %v586, %v643
    %v663 = vmul.f32 %v587, %v647
    %v664 = vmul.f32 %v588, %v643
    %v665 = vmul.f32 %v589, %v647
    %v666 = vmul.f32 %v590, %v643
    %v667 = vmul.f32 %v591, %v647
    %v668 = vmul.f32 %v592, %v643
    %v669 = vmul.f32 %v593, %v647
    %v670 = vmul.f32 %v594, %v643
    %v671 = vmul.f32 %v595, %v647
    %v672 = vmul.f32 %v596, %v643
    %v673 = vmul.f32 %v597, %v647
    %v674 = vmul.f32 %v598, %v643
    %v675 = vmul.f32 %v599, %v647
    %v676 = vmul.f32 %v600, %v643
    %v677 = vmul.f32 %v601, %v647
    %v678 = vmul.f32 %v602, %v643
    %v679 = vmul.f32 %v603, %v647
    %v680 = vmul.f32 %v604, %v643
    %v681 = vmul.f32 %v605, %v647
    %v682 = vmul.f32 %v606, %v643
    %v683 = vmul.f32 %v607, %v647
    %v684 = vmul.f32 %v608, %v643
    %v685 = vmul.f32 %v609, %v647
    %v686 = vmul.f32 %v610, %v643
    %v687 = vmul.f32 %v611, %v647
    %v688 = vmul.f32 %v612, %v643
    %v689 = vmul.f32 %v613, %v647
    %v690 = vmul.f32 %v614, %v643
    %v691 = vmul.f32 %v615, %v647
    %v692 = vmul.f32 %v616, %v643
    %v693 = vmul.f32 %v617, %v647
    %v694 = vmul.f32 %v618, %v643
    %v695 = vmul.f32 %v619, %v647
    %v696 = vmul.f32 %v620, %v643
    %v697 = vmul.f32 %v621, %v647
    %v698 = vmul.f32 %v622, %v643
    %v699 = vmul.f32 %v623, %v647
    %v700 = vmul.f32 %v624, %v643
    %v701 = vmul.f32 %v625, %v647
    %v702 = vmul.f32 %v626, %v643
    %v703 = vmul.f32 %v627, %v647
    %v704 = vmul.f32 %v628, %v643
    %v705 = vmul.f32 %v629, %v647
    %v706 = vmul.f32 %v630, %v643
    %v707 = vmul.f32 %v631, %v647
    %v708 = vmul.f32 %v632, %v643
    %v709 = vmul.f32 %v633, %v647
    %v710 = vmul.f32 %v634, %v643
    %v711 = vmul.f32 %v635, %v647
    %v712 = vmul.f32 %v636, %v643
    %v713 = vmul.f32 %v637, %v647
    %v714 = vld [vmem:[%s2] sm:$0x3]
    %v716 = vlaneseq
    %v717 = vshrl.u32 %v716, 7
    %v718 = vsub.s32 0, %v717
    %v719 = vrot.slane %v714, %v718
    %v720 = vlaneseq
    %v721 = vshrl.u32 %v720, 7
    %v722 = vsub.s32 1, %v721
    %v723 = vrot.slane %v714, %v722
    %v726 = vadd.f32 %v650, %v719
    %v727 = vadd.f32 %v651, %v723
    %v728 = vadd.f32 %v652, %v719
    %v729 = vadd.f32 %v653, %v723
    %v730 = vadd.f32 %v654, %v719
    %v731 = vadd.f32 %v655, %v723
    %v732 = vadd.f32 %v656, %v719
    %v733 = vadd.f32 %v657, %v723
    %v734 = vadd.f32 %v658, %v719
    %v735 = vadd.f32 %v659, %v723
    %v736 = vadd.f32 %v660, %v719
    %v737 = vadd.f32 %v661, %v723
    %v738 = vadd.f32 %v662, %v719
    %v739 = vadd.f32 %v663, %v723
    %v740 = vadd.f32 %v664, %v719
    %v741 = vadd.f32 %v665, %v723
    %v742 = vadd.f32 %v666, %v719
    %v743 = vadd.f32 %v667, %v723
    %v744 = vadd.f32 %v668, %v719
    %v745 = vadd.f32 %v669, %v723
    %v746 = vadd.f32 %v670, %v719
    %v747 = vadd.f32 %v671, %v723
    %v748 = vadd.f32 %v672, %v719
    %v749 = vadd.f32 %v673, %v723
    %v750 = vadd.f32 %v674, %v719
    %v751 = vadd.f32 %v675, %v723
    %v752 = vadd.f32 %v676, %v719
    %v753 = vadd.f32 %v677, %v723
    %v754 = vadd.f32 %v678, %v719
    %v755 = vadd.f32 %v679, %v723
    %v756 = vadd.f32 %v680, %v719
    %v757 = vadd.f32 %v681, %v723
    %v758 = vadd.f32 %v682, %v719
    %v759 = vadd.f32 %v683, %v723
    %v760 = vadd.f32 %v684, %v719
    %v761 = vadd.f32 %v685, %v723
    %v762 = vadd.f32 %v686, %v719
    %v763 = vadd.f32 %v687, %v723
    %v764 = vadd.f32 %v688, %v719
    %v765 = vadd.f32 %v689, %v723
    %v766 = vadd.f32 %v690, %v719
    %v767 = vadd.f32 %v691, %v723
    %v768 = vadd.f32 %v692, %v719
    %v769 = vadd.f32 %v693, %v723
    %v770 = vadd.f32 %v694, %v719
    %v771 = vadd.f32 %v695, %v723
    %v772 = vadd.f32 %v696, %v719
    %v773 = vadd.f32 %v697, %v723
    %v774 = vadd.f32 %v698, %v719
    %v775 = vadd.f32 %v699, %v723
    %v776 = vadd.f32 %v700, %v719
    %v777 = vadd.f32 %v701, %v723
    %v778 = vadd.f32 %v702, %v719
    %v779 = vadd.f32 %v703, %v723
    %v780 = vadd.f32 %v704, %v719
    %v781 = vadd.f32 %v705, %v723
    %v782 = vadd.f32 %v706, %v719
    %v783 = vadd.f32 %v707, %v723
    %v784 = vadd.f32 %v708, %v719
    %v785 = vadd.f32 %v709, %v723
    %v786 = vadd.f32 %v710, %v719
    %v787 = vadd.f32 %v711, %v723
    %v788 = vadd.f32 %v712, %v719
    %v789 = vadd.f32 %v713, %v723
    %v790 = vpack.c.bf16 %v728, %v726
    %v791 = vpack.c.bf16 %v729, %v727
    %v792 = vpack.c.bf16 %v732, %v730
    %v793 = vpack.c.bf16 %v733, %v731
    %v794 = vpack.c.bf16 %v736, %v734
    %v795 = vpack.c.bf16 %v737, %v735
    %v796 = vpack.c.bf16 %v740, %v738
    %v797 = vpack.c.bf16 %v741, %v739
    %v798 = vpack.c.bf16 %v744, %v742
    %v799 = vpack.c.bf16 %v745, %v743
    %v800 = vpack.c.bf16 %v748, %v746
    %v801 = vpack.c.bf16 %v749, %v747
    %v802 = vpack.c.bf16 %v752, %v750
    %v803 = vpack.c.bf16 %v753, %v751
    %v804 = vpack.c.bf16 %v756, %v754
    %v805 = vpack.c.bf16 %v757, %v755
    %v806 = vpack.c.bf16 %v760, %v758
    %v807 = vpack.c.bf16 %v761, %v759
    %v808 = vpack.c.bf16 %v764, %v762
    %v809 = vpack.c.bf16 %v765, %v763
    %v810 = vpack.c.bf16 %v768, %v766
    %v811 = vpack.c.bf16 %v769, %v767
    %v812 = vpack.c.bf16 %v772, %v770
    %v813 = vpack.c.bf16 %v773, %v771
    %v814 = vpack.c.bf16 %v776, %v774
    %v815 = vpack.c.bf16 %v777, %v775
    %v816 = vpack.c.bf16 %v780, %v778
    %v817 = vpack.c.bf16 %v781, %v779
    %v818 = vpack.c.bf16 %v784, %v782
    %v819 = vpack.c.bf16 %v785, %v783
    %v820 = vpack.c.bf16 %v788, %v786
    %v821 = vpack.c.bf16 %v789, %v787
    %v854 = vunpack.c.l.b16 %v790
    %v855 = vunpack.c.l.b16 %v791
    %v856 = vunpack.c.h.b16 %v790
    %v857 = vunpack.c.h.b16 %v791
    %v858 = vunpack.c.l.b16 %v792
    %v859 = vunpack.c.l.b16 %v793
    %v860 = vunpack.c.h.b16 %v792
    %v861 = vunpack.c.h.b16 %v793
    %v862 = vunpack.c.l.b16 %v794
    %v863 = vunpack.c.l.b16 %v795
    %v864 = vunpack.c.h.b16 %v794
    %v865 = vunpack.c.h.b16 %v795
    %v866 = vunpack.c.l.b16 %v796
    %v867 = vunpack.c.l.b16 %v797
    %v868 = vunpack.c.h.b16 %v796
    %v869 = vunpack.c.h.b16 %v797
    %v870 = vunpack.c.l.b16 %v798
    %v871 = vunpack.c.l.b16 %v799
    %v872 = vunpack.c.h.b16 %v798
    %v873 = vunpack.c.h.b16 %v799
    %v874 = vunpack.c.l.b16 %v800
    %v875 = vunpack.c.l.b16 %v801
    %v876 = vunpack.c.h.b16 %v800
    %v877 = vunpack.c.h.b16 %v801
    %v878 = vunpack.c.l.b16 %v802
    %v879 = vunpack.c.l.b16 %v803
    %v880 = vunpack.c.h.b16 %v802
    %v881 = vunpack.c.h.b16 %v803
    %v882 = vunpack.c.l.b16 %v804
    %v883 = vunpack.c.l.b16 %v805
    %v884 = vunpack.c.h.b16 %v804
    %v885 = vunpack.c.h.b16 %v805
    %v886 = vunpack.c.l.b16 %v806
    %v887 = vunpack.c.l.b16 %v807
    %v888 = vunpack.c.h.b16 %v806
    %v889 = vunpack.c.h.b16 %v807
    %v890 = vunpack.c.l.b16 %v808
    %v891 = vunpack.c.l.b16 %v809
    %v892 = vunpack.c.h.b16 %v808
    %v893 = vunpack.c.h.b16 %v809
    %v894 = vunpack.c.l.b16 %v810
    %v895 = vunpack.c.l.b16 %v811
    %v896 = vunpack.c.h.b16 %v810
    %v897 = vunpack.c.h.b16 %v811
    %v898 = vunpack.c.l.b16 %v812
    %v899 = vunpack.c.l.b16 %v813
    %v900 = vunpack.c.h.b16 %v812
    %v901 = vunpack.c.h.b16 %v813
    %v902 = vunpack.c.l.b16 %v814
    %v903 = vunpack.c.l.b16 %v815
    %v904 = vunpack.c.h.b16 %v814
    %v905 = vunpack.c.h.b16 %v815
    %v906 = vunpack.c.l.b16 %v816
    %v907 = vunpack.c.l.b16 %v817
    %v908 = vunpack.c.h.b16 %v816
    %v909 = vunpack.c.h.b16 %v817
    %v910 = vunpack.c.l.b16 %v818
    %v911 = vunpack.c.l.b16 %v819
    %v912 = vunpack.c.h.b16 %v818
    %v913 = vunpack.c.h.b16 %v819
    %v914 = vunpack.c.l.b16 %v820
    %v915 = vunpack.c.l.b16 %v821
    %v916 = vunpack.c.h.b16 %v820
    %v917 = vunpack.c.h.b16 %v821
    %v918 = vpack.c.b16 %v855, %v854
    %v919 = vpack.c.b16 %v857, %v856
    %v920 = vpack.c.b16 %v859, %v858
    %v921 = vpack.c.b16 %v861, %v860
    %v922 = vpack.c.b16 %v863, %v862
    %v923 = vpack.c.b16 %v865, %v864
    %v924 = vpack.c.b16 %v867, %v866
    %v925 = vpack.c.b16 %v869, %v868
    %v926 = vpack.c.b16 %v871, %v870
    %v927 = vpack.c.b16 %v873, %v872
    %v928 = vpack.c.b16 %v875, %v874
    %v929 = vpack.c.b16 %v877, %v876
    %v930 = vpack.c.b16 %v879, %v878
    %v931 = vpack.c.b16 %v881, %v880
    %v932 = vpack.c.b16 %v883, %v882
    %v933 = vpack.c.b16 %v885, %v884
    %v934 = vpack.c.b16 %v887, %v886
    %v935 = vpack.c.b16 %v889, %v888
    %v936 = vpack.c.b16 %v891, %v890
    %v937 = vpack.c.b16 %v893, %v892
    %v938 = vpack.c.b16 %v895, %v894
    %v939 = vpack.c.b16 %v897, %v896
    %v940 = vpack.c.b16 %v899, %v898
    %v941 = vpack.c.b16 %v901, %v900
    %v942 = vpack.c.b16 %v903, %v902
    %v943 = vpack.c.b16 %v905, %v904
    %v944 = vpack.c.b16 %v907, %v906
    %v945 = vpack.c.b16 %v909, %v908
    %v946 = vpack.c.b16 %v911, %v910
    %v947 = vpack.c.b16 %v913, %v912
    %v948 = vpack.c.b16 %v915, %v914
    %v949 = vpack.c.b16 %v917, %v916
    %982 = vst [vmem:[#allocation5] sm:$0xff] %v918
    %983 = vst [vmem:[#allocation5 + $0x8] sm:$0xff] %v919
    %984 = vst [vmem:[#allocation5 + $0x10] sm:$0xff] %v920
    %985 = vst [vmem:[#allocation5 + $0x18] sm:$0xff] %v921
    %986 = vst [vmem:[#allocation5 + $0x20] sm:$0xff] %v922
    %987 = vst [vmem:[#allocation5 + $0x28] sm:$0xff] %v923
    %988 = vst [vmem:[#allocation5 + $0x30] sm:$0xff] %v924
    %989 = vst [vmem:[#allocation5 + $0x38] sm:$0xff] %v925
    %990 = vst [vmem:[#allocation5 + $0x40] sm:$0xff] %v926
    %991 = vst [vmem:[#allocation5 + $0x48] sm:$0xff] %v927
    %992 = vst [vmem:[#allocation5 + $0x50] sm:$0xff] %v928
    %993 = vst [vmem:[#allocation5 + $0x58] sm:$0xff] %v929
    %994 = vst [vmem:[#allocation5 + $0x60] sm:$0xff] %v930
    %995 = vst [vmem:[#allocation5 + $0x68] sm:$0xff] %v931
    %996 = vst [vmem:[#allocation5 + $0x70] sm:$0xff] %v932
    %997 = vst [vmem:[#allocation5 + $0x78] sm:$0xff] %v933
    %998 = vst [vmem:[#allocation5 + $0x80] sm:$0xff] %v934
    %999 = vst [vmem:[#allocation5 + $0x88] sm:$0xff] %v935
    %1000 = vst [vmem:[#allocation5 + $0x90] sm:$0xff] %v936
    %1001 = vst [vmem:[#allocation5 + $0x98] sm:$0xff] %v937
    %1002 = vst [vmem:[#allocation5 + $0xa0] sm:$0xff] %v938
    %1003 = vst [vmem:[#allocation5 + $0xa8] sm:$0xff] %v939
    %1004 = vst [vmem:[#allocation5 + $0xb0] sm:$0xff] %v940
    %1005 = vst [vmem:[#allocation5 + $0xb8] sm:$0xff] %v941
    %1006 = vst [vmem:[#allocation5 + $0xc0] sm:$0xff] %v942
    %1007 = vst [vmem:[#allocation5 + $0xc8] sm:$0xff] %v943
    %1008 = vst [vmem:[#allocation5 + $0xd0] sm:$0xff] %v944
    %1009 = vst [vmem:[#allocation5 + $0xd8] sm:$0xff] %v945
    %1010 = vst [vmem:[#allocation5 + $0xe0] sm:$0xff] %v946
    %1011 = vst [vmem:[#allocation5 + $0xe8] sm:$0xff] %v947
    %1012 = vst [vmem:[#allocation5 + $0xf0] sm:$0xff] %v948
    %1013 = vst [vmem:[#allocation5 + $0xf8] sm:$0xff] %v949
    // Predicated region
    $region18: #{tpu_custom_call.1} parent=1 // pred_check
      _
    $region19: #{tpu_custom_call.1} parent=1 // pred_check_branch
      %1015 = sbr.rel (0) target = $region21
    $region20: #{tpu_custom_call.1} parent=1 // pred_region
      %s1017 = ssub.s32 4096, 4096
      %1018 = vsyncadd [#allocation4], %s1017
      %s1019 = sshll.u32 [#allocation5], 4
      %s1020 = int_to_ptr.vmem [resolvable:$true] %s1019
      %1025 = dma.vmem_to_hbm [thread:$0]  %s1020, 4096, %s3, [#allocation4], 128, 128, 8
    $region21: #{tpu_custom_call.1} parent=1 // pred_fallthru
      _
    // Predicated region
    $region22: #{tpu_custom_call.1} parent=1 // pred_check
      _
    $region23: #{tpu_custom_call.1} parent=1 // pred_check_branch
      %1027 = sbr.rel (0) target = $region25
    $region24: #{tpu_custom_call.1} parent=1 // pred_region
      %1028 = dma.done [#allocation4], 4096
    $region25: #{tpu_custom_call.1} parent=1 // pred_fallthru
      _
    %1029 = vsyncpa [#allocation3], 1
    %1030 = vsyncpa [#allocation4], 1

</llo_original>
